<compile_context>
chip_gen: v5e
topology: v5e:2x2
jax: 0.10.0
libtpu: 0.0.40
codegen_flags: <defaults>
</compile_context>

<pallas_src>
import jax
import jax.numpy as jnp
from jax.experimental import pallas as pl
from jax.experimental.pallas import tpu as pltpu


def _mlp_fused_kernel(x_ref, w0_ref, s0_ref, w1_ref, s1_ref,
                      w2_ref, s2_ref, w3_ref, s3_ref, o_ref):
    """Single-launch fused 4-layer MLP (eval mode).

    Each layer computes y = x @ w' + shift', where BN running statistics and
    the Linear bias have been folded into (w', shift') at init time. Hidden
    layers apply ReLU. Matmuls run in bf16 on the MXU with f32 accumulation;
    the epilogue stays in f32.
    """
    h = jnp.dot(x_ref[...], w0_ref[...], preferred_element_type=jnp.float32)
    h = jnp.maximum(h + s0_ref[...], 0.0)

    h = jnp.dot(h.astype(jnp.bfloat16), w1_ref[...],
                preferred_element_type=jnp.float32)
    h = jnp.maximum(h + s1_ref[...], 0.0)

    h = jnp.dot(h.astype(jnp.bfloat16), w2_ref[...],
                preferred_element_type=jnp.float32)
    h = jnp.maximum(h + s2_ref[...], 0.0)

    y = jnp.dot(h.astype(jnp.bfloat16), w3_ref[...],
                preferred_element_type=jnp.float32)
    o_ref[...] = (y + s3_ref[...]).astype(o_ref.dtype)


def _full_spec(shape):
    # Full-array block, single grid point.
    return pl.BlockSpec(shape, lambda i: (0,) * len(shape))


def init_params(key, input_dim, hidden_dim, num_classes, eps=1e-5):
    """Folded parameters.

    Hidden layers: BN (eval, default running stats) + bias folded into the
    weight/shift.  Classifier: no BN; padded to a 128-lane-multiple output.
    Weights stored as bf16, shifts as f32 (1, N).
    """
    dims = [input_dim] + list(hidden_dim) + [num_classes]
    n_pad = max(128, -(-num_classes // 128) * 128)
    params = []
    keys = jax.random.split(key, len(dims) - 1)
    for i, (din, dout) in enumerate(zip(dims[:-1], dims[1:])):
        kw, kb = jax.random.split(keys[i])
        w = jax.random.normal(kw, (din, dout), jnp.float32) * 0.02
        b = jax.random.normal(kb, (dout,), jnp.float32) * 0.01
        if i < len(hidden_dim):
            gamma = jnp.ones((dout,), jnp.float32)
            beta = jnp.zeros((dout,), jnp.float32)
            running_mean = jnp.zeros((dout,), jnp.float32)
            running_var = jnp.ones((dout,), jnp.float32)
            scale = gamma / jnp.sqrt(running_var + eps)
            w_f = w * scale[None, :]
            shift = (b - running_mean) * scale + beta
        else:
            # classifier: zero-pad output dim to a multiple of 128 lanes
            w_f = jnp.pad(w, ((0, 0), (0, n_pad - dout)))
            shift = jnp.pad(b, (0, n_pad - dout))
        params.append((w_f.astype(jnp.bfloat16),
                       shift.reshape(1, -1).astype(jnp.float32)))
    return params


def mlp_forward(x_nchw, params, num_classes):
    B = x_nchw.shape[0]
    x = x_nchw.reshape(B, -1)                        # nn.Flatten()
    B_pad = max(8, -(-B // 8) * 8)                   # fill vreg sublanes
    if B_pad != B:
        x = jnp.pad(x, ((0, B_pad - B), (0, 0)))
    x = x.astype(jnp.bfloat16)

    (w0, s0), (w1, s1), (w2, s2), (w3, s3) = params
    n_pad = w3.shape[1]

    in_arrays = [x, w0, s0, w1, s1, w2, s2, w3, s3]
    in_specs = [_full_spec(a.shape) for a in in_arrays]

    out = pl.pallas_call(
        _mlp_fused_kernel,
        out_shape=jax.ShapeDtypeStruct((B_pad, n_pad), jnp.float32),
        grid_spec=pltpu.PrefetchScalarGridSpec(
            num_scalar_prefetch=0,
            grid=(1,),
            in_specs=in_specs,
            out_specs=_full_spec((B_pad, n_pad)),
        ),
        compiler_params=pltpu.CompilerParams(
            dimension_semantics=("arbitrary",),
            vmem_limit_bytes=32 << 20,
        ),
    )(*in_arrays)
    return out[:B, :num_classes]


if __name__ == "__main__":
    # Small shapes consistent with the module: (B, C, H, W) = (2, 3, 16, 16)
    # -> input_dim = 768, hidden = [256, 128, 128], num_classes = 40.
    B, C, H, W = 2, 3, 16, 16
    input_dim = C * H * W
    hidden_dim = [256, 128, 128]
    num_classes = 40

    key = jax.random.PRNGKey(0)
    kx, kp = jax.random.split(key)
    x = jax.random.normal(kx, (B, C, H, W), jnp.float32)
    params = init_params(kp, input_dim, hidden_dim, num_classes)

    out = mlp_forward(x, params, num_classes)
    out = jax.block_until_ready(out)

    # Pure-JAX reference with identical folded bf16 weights / f32 accumulation
    # (eval-mode semantics: BN uses running stats, Dropout is identity).
    def ref_forward(x_nchw, params, num_classes):
        xr = x_nchw.reshape(x_nchw.shape[0], -1).astype(jnp.bfloat16)
        n_hidden = len(params) - 1
        y = None
        for i, (w, s) in enumerate(params):
            y = jnp.dot(xr, w, preferred_element_type=jnp.float32) + s
            if i < n_hidden:
                y = jnp.maximum(y, 0.0)
                xr = y.astype(jnp.bfloat16)
        return y[:, :num_classes]

    ref = ref_forward(x, params, num_classes)
    assert out.shape == (B, num_classes), out.shape
    assert jnp.allclose(out, ref, atol=1e-2, rtol=1e-2), \
        float(jnp.max(jnp.abs(out - ref)))

    print("KERNEL_OK")
</pallas_src>

<mosaic_0001>
module attributes {stable_mosaic.version = 11 : i64} {
  func.func @_mlp_fused_kernel(%arg0: i32, %arg1: memref<8x768xbf16, #tpu.memory_space<vmem>>, %arg2: memref<768x256xbf16, #tpu.memory_space<vmem>>, %arg3: memref<1x256xf32, #tpu.memory_space<vmem>>, %arg4: memref<256x128xbf16, #tpu.memory_space<vmem>>, %arg5: memref<1x128xf32, #tpu.memory_space<vmem>>, %arg6: memref<128x128xbf16, #tpu.memory_space<vmem>>, %arg7: memref<1x128xf32, #tpu.memory_space<vmem>>, %arg8: memref<128x128xbf16, #tpu.memory_space<vmem>>, %arg9: memref<1x128xf32, #tpu.memory_space<vmem>>, %arg10: memref<8x128xf32, #tpu.memory_space<vmem>>) attributes {dimension_semantics = [#tpu.dimension_semantics<arbitrary>], iteration_bounds = array<i64: 1>, scalar_prefetch = 0 : i64, scratch_operands = 0 : i64, tpu.core_type = #tpu.core_type<tc>, window_params = [{pipeline_mode = #tpu.pipeline_mode<synchronous>, transform_indices = @transform_0, window_bounds = array<i64: 8, 768>}, {pipeline_mode = #tpu.pipeline_mode<synchronous>, transform_indices = @transform_1, window_bounds = array<i64: 768, 256>}, {pipeline_mode = #tpu.pipeline_mode<synchronous>, transform_indices = @transform_2, window_bounds = array<i64: 1, 256>}, {pipeline_mode = #tpu.pipeline_mode<synchronous>, transform_indices = @transform_3, window_bounds = array<i64: 256, 128>}, {pipeline_mode = #tpu.pipeline_mode<synchronous>, transform_indices = @transform_4, window_bounds = array<i64: 1, 128>}, {pipeline_mode = #tpu.pipeline_mode<synchronous>, transform_indices = @transform_5, window_bounds = array<i64: 128, 128>}, {pipeline_mode = #tpu.pipeline_mode<synchronous>, transform_indices = @transform_6, window_bounds = array<i64: 1, 128>}, {pipeline_mode = #tpu.pipeline_mode<synchronous>, transform_indices = @transform_7, window_bounds = array<i64: 128, 128>}, {pipeline_mode = #tpu.pipeline_mode<synchronous>, transform_indices = @transform_8, window_bounds = array<i64: 1, 128>}, {pipeline_mode = #tpu.pipeline_mode<synchronous>, transform_indices = @transform_9, window_bounds = array<i64: 8, 128>}]} {
    %c0 = arith.constant 0 : index
    %c0_0 = arith.constant 0 : index
    %0 = vector.load %arg1[%c0, %c0_0] : memref<8x768xbf16, #tpu.memory_space<vmem>>, vector<8x768xbf16>
    %c0_1 = arith.constant 0 : index
    %c0_2 = arith.constant 0 : index
    %1 = vector.load %arg2[%c0_1, %c0_2] : memref<768x256xbf16, #tpu.memory_space<vmem>>, vector<768x256xbf16>
    %cst = arith.constant dense<0.000000e+00> : vector<8x256xf32>
    %2 = tpu.matmul %0, %1, %cst {dimension_numbers = #tpu.dot_dimension_numbers<[1], [0], [0], [1], [0, 0, 1, 1], [], []>} : vector<8x768xbf16>, vector<768x256xbf16>, vector<8x256xf32> -> vector<8x256xf32>
    %c0_3 = arith.constant 0 : index
    %c0_4 = arith.constant 0 : index
    %3 = vector.load %arg3[%c0_3, %c0_4] : memref<1x256xf32, #tpu.memory_space<vmem>>, vector<1x256xf32>
    %4 = vector.broadcast %3 : vector<1x256xf32> to vector<8x256xf32>
    %5 = arith.addf %2, %4 : vector<8x256xf32>
    %cst_5 = arith.constant 0.000000e+00 : f32
    %6 = vector.broadcast %cst_5 : f32 to vector<8x256xf32>
    %7 = arith.maximumf %5, %6 : vector<8x256xf32>
    %8 = arith.truncf %7 : vector<8x256xf32> to vector<8x256xbf16>
    %c0_6 = arith.constant 0 : index
    %c0_7 = arith.constant 0 : index
    %9 = vector.load %arg4[%c0_6, %c0_7] : memref<256x128xbf16, #tpu.memory_space<vmem>>, vector<256x128xbf16>
    %cst_8 = arith.constant dense<0.000000e+00> : vector<8x128xf32>
    %10 = tpu.matmul %8, %9, %cst_8 {dimension_numbers = #tpu.dot_dimension_numbers<[1], [0], [0], [1], [0, 0, 1, 1], [], []>} : vector<8x256xbf16>, vector<256x128xbf16>, vector<8x128xf32> -> vector<8x128xf32>
    %c0_9 = arith.constant 0 : index
    %c0_10 = arith.constant 0 : index
    %11 = vector.load %arg5[%c0_9, %c0_10] : memref<1x128xf32, #tpu.memory_space<vmem>>, vector<1x128xf32>
    %12 = vector.broadcast %11 : vector<1x128xf32> to vector<8x128xf32>
    %13 = arith.addf %10, %12 : vector<8x128xf32>
    %cst_11 = arith.constant 0.000000e+00 : f32
    %14 = vector.broadcast %cst_11 : f32 to vector<8x128xf32>
    %15 = arith.maximumf %13, %14 : vector<8x128xf32>
    %16 = arith.truncf %15 : vector<8x128xf32> to vector<8x128xbf16>
    %c0_12 = arith.constant 0 : index
    %c0_13 = arith.constant 0 : index
    %17 = vector.load %arg6[%c0_12, %c0_13] : memref<128x128xbf16, #tpu.memory_space<vmem>>, vector<128x128xbf16>
    %cst_14 = arith.constant dense<0.000000e+00> : vector<8x128xf32>
    %18 = tpu.matmul %16, %17, %cst_14 {dimension_numbers = #tpu.dot_dimension_numbers<[1], [0], [0], [1], [0, 0, 1, 1], [], []>} : vector<8x128xbf16>, vector<128x128xbf16>, vector<8x128xf32> -> vector<8x128xf32>
    %c0_15 = arith.constant 0 : index
    %c0_16 = arith.constant 0 : index
    %19 = vector.load %arg7[%c0_15, %c0_16] : memref<1x128xf32, #tpu.memory_space<vmem>>, vector<1x128xf32>
    %20 = vector.broadcast %19 : vector<1x128xf32> to vector<8x128xf32>
    %21 = arith.addf %18, %20 : vector<8x128xf32>
    %cst_17 = arith.constant 0.000000e+00 : f32
    %22 = vector.broadcast %cst_17 : f32 to vector<8x128xf32>
    %23 = arith.maximumf %21, %22 : vector<8x128xf32>
    %24 = arith.truncf %23 : vector<8x128xf32> to vector<8x128xbf16>
    %c0_18 = arith.constant 0 : index
    %c0_19 = arith.constant 0 : index
    %25 = vector.load %arg8[%c0_18, %c0_19] : memref<128x128xbf16, #tpu.memory_space<vmem>>, vector<128x128xbf16>
    %cst_20 = arith.constant dense<0.000000e+00> : vector<8x128xf32>
    %26 = tpu.matmul %24, %25, %cst_20 {dimension_numbers = #tpu.dot_dimension_numbers<[1], [0], [0], [1], [0, 0, 1, 1], [], []>} : vector<8x128xbf16>, vector<128x128xbf16>, vector<8x128xf32> -> vector<8x128xf32>
    %c0_21 = arith.constant 0 : index
    %c0_22 = arith.constant 0 : index
    %27 = vector.load %arg9[%c0_21, %c0_22] : memref<1x128xf32, #tpu.memory_space<vmem>>, vector<1x128xf32>
    %28 = vector.broadcast %27 : vector<1x128xf32> to vector<8x128xf32>
    %29 = arith.addf %26, %28 : vector<8x128xf32>
    %c0_23 = arith.constant 0 : index
    %c0_24 = arith.constant 0 : index
    %30 = vector.load %arg10[%c0_23, %c0_24] : memref<8x128xf32, #tpu.memory_space<vmem>>, vector<8x128xf32>
    tpu.vector_store %arg10[%c0_23, %c0_24], %29 {strides = array<i32>} : memref<8x128xf32, #tpu.memory_space<vmem>>, vector<8x128xf32>,
    return
  }
  func.func @transform_0(%arg0: i32) -> (i32, i32) {
    %c0_i32 = arith.constant 0 : i32
    %c0_i32_0 = arith.constant 0 : i32
    %c0_i32_1 = arith.constant 0 : i32
    return %c0_i32, %c0_i32_0 : i32, i32
  }
  func.func @transform_1(%arg0: i32) -> (i32, i32) {
    %c0_i32 = arith.constant 0 : i32
    %c0_i32_0 = arith.constant 0 : i32
    %c0_i32_1 = arith.constant 0 : i32
    return %c0_i32, %c0_i32_0 : i32, i32
  }
  func.func @transform_2(%arg0: i32) -> (i32, i32) {
    %c0_i32 = arith.constant 0 : i32
    %c0_i32_0 = arith.constant 0 : i32
    %c0_i32_1 = arith.constant 0 : i32
    return %c0_i32, %c0_i32_0 : i32, i32
  }
  func.func @transform_3(%arg0: i32) -> (i32, i32) {
    %c0_i32 = arith.constant 0 : i32
    %c0_i32_0 = arith.constant 0 : i32
    %c0_i32_1 = arith.constant 0 : i32
    return %c0_i32, %c0_i32_0 : i32, i32
  }
  func.func @transform_4(%arg0: i32) -> (i32, i32) {
    %c0_i32 = arith.constant 0 : i32
    %c0_i32_0 = arith.constant 0 : i32
    %c0_i32_1 = arith.constant 0 : i32
    return %c0_i32, %c0_i32_0 : i32, i32
  }
  func.func @transform_5(%arg0: i32) -> (i32, i32) {
    %c0_i32 = arith.constant 0 : i32
    %c0_i32_0 = arith.constant 0 : i32
    %c0_i32_1 = arith.constant 0 : i32
    return %c0_i32, %c0_i32_0 : i32, i32
  }
  func.func @transform_6(%arg0: i32) -> (i32, i32) {
    %c0_i32 = arith.constant 0 : i32
    %c0_i32_0 = arith.constant 0 : i32
    %c0_i32_1 = arith.constant 0 : i32
    return %c0_i32, %c0_i32_0 : i32, i32
  }
  func.func @transform_7(%arg0: i32) -> (i32, i32) {
    %c0_i32 = arith.constant 0 : i32
    %c0_i32_0 = arith.constant 0 : i32
    %c0_i32_1 = arith.constant 0 : i32
    return %c0_i32, %c0_i32_0 : i32, i32
  }
  func.func @transform_8(%arg0: i32) -> (i32, i32) {
    %c0_i32 = arith.constant 0 : i32
    %c0_i32_0 = arith.constant 0 : i32
    %c0_i32_1 = arith.constant 0 : i32
    return %c0_i32, %c0_i32_0 : i32, i32
  }
  func.func @transform_9(%arg0: i32) -> (i32, i32) {
    %c0_i32 = arith.constant 0 : i32
    %c0_i32_0 = arith.constant 0 : i32
    %c0_i32_1 = arith.constant 0 : i32
    return %c0_i32, %c0_i32_0 : i32, i32
  }
}

</mosaic_0001>

<llo_original>
// kernel: tpu_custom_call.1
$region0: #{tpu_custom_call.1}
  #allocation0 [shape = 'u32[]', space=smem, size = 0x4, offset = 0x4, fixed_abs, tag = 'smem constant byte address 0x4 - core index']
  #allocation1 [shape = 'u32[72,128]{1,0:T(1,128)}', space=vmem, size = 0x9000, scoped, tag = 'internal scratch']
  %s0 = inlined_call_operand.hbm [shape: bf16[8,768], index: 0, kind: input, shape index: {}]
  %s1 = inlined_call_operand.hbm [shape: bf16[768,256], index: 1, kind: input, shape index: {}]
  %s2 = inlined_call_operand.hbm [shape: f32[1,256], index: 2, kind: input, shape index: {}]
  %s3 = inlined_call_operand.hbm [shape: bf16[256,128], index: 3, kind: input, shape index: {}]
  %s4 = inlined_call_operand.vmem [shape: f32[1,128], index: 4, kind: input, shape index: {}]
  %s5 = inlined_call_operand.hbm [shape: bf16[128,128], index: 5, kind: input, shape index: {}]
  %s6 = inlined_call_operand.vmem [shape: f32[1,128], index: 6, kind: input, shape index: {}]
  %s7 = inlined_call_operand.hbm [shape: bf16[128,128], index: 7, kind: input, shape index: {}]
  %s8 = inlined_call_operand.vmem [shape: f32[1,128], index: 8, kind: input, shape index: {}]
  %s9 = inlined_call_operand.hbm [shape: f32[8,128], index: 9, kind: output, shape index: {}]
  %s10 = sld [smem:[#allocation0]]
  $region70: #{tpu_custom_call.1} parent=0
    _
  %s12 = ssub.s32 1, %s10
  %s13 = scalar_select 0, %s12, %s10
  $region1: #{tpu_custom_call.1} parent=0
    #allocation2 [shape = 'u8[12288]{0}', space=vmem, size = 0x3000, scoped, tag = 'input window, operand 0, single buffered']
    #allocation3 [shape = 's32[1]{0}', space=sflag, size = 0x4, scoped, tag = 'scoped memory for tpu_custom_call.1']
    #allocation4 [shape = 's32[1]{0}', space=sflag, size = 0x4, scoped, tag = 'scoped memory for tpu_custom_call.1']
    #allocation5 [shape = 'u8[393216]{0}', space=vmem, size = 0x60000, scoped, tag = 'input window, operand 1, single buffered']
    #allocation6 [shape = 's32[1]{0}', space=sflag, size = 0x4, scoped, tag = 'scoped memory for tpu_custom_call.1']
    #allocation7 [shape = 'u8[1024]{0}', space=vmem, size = 0x400, scoped, tag = 'input window, operand 2, single buffered']
    #allocation8 [shape = 'u8[65536]{0}', space=vmem, size = 0x10000, scoped, tag = 'input window, operand 3, single buffered']
    #allocation9 [shape = 's32[1]{0}', space=sflag, size = 0x4, scoped, tag = 'scoped memory for tpu_custom_call.1']
    #allocation10 [shape = 'u8[32768]{0}', space=vmem, size = 0x8000, scoped, tag = 'input window, operand 5, single buffered']
    #allocation11 [shape = 'u8[32768]{0}', space=vmem, size = 0x8000, scoped, tag = 'input window, operand 7, single buffered']
    #allocation12 [shape = 's32[1]{0}', space=sflag, size = 0x4, scoped, tag = 'scoped memory for tpu_custom_call.1']
    #allocation13 [shape = 'u8[4096]{0}', space=vmem, size = 0x1000, scoped, tag = 'output window, operand 0, single buffered']
    %14 = vsyncpa [#allocation3], 0
    %15 = vsyncpa [#allocation6], 0
    %16 = vsyncpa [#allocation9], 0
    %17 = vsyncpa [#allocation12], 0
    %18 = vsyncpa [#allocation4], 0
    // Predicated region
    $region2: #{tpu_custom_call.1} parent=1 // pred_check
      _
    $region3: #{tpu_custom_call.1} parent=1 // pred_check_branch
      %20 = sbr.rel (0) target = $region5
    $region4: #{tpu_custom_call.1} parent=1 // pred_region
      %22 = vsyncadd [#allocation3], 0
      %s24 = sshll.u32 %s0, 4
      %s25 = int_to_ptr.hbm [resolvable:$true] %s24
      %s26 = sshll.u32 [#allocation2], 4
      %s27 = int_to_ptr.vmem [resolvable:$true] %s26
      %29 = dma.hbm_to_vmem [thread:$0]  %s25, 384, %s27, [#allocation3]
    $region5: #{tpu_custom_call.1} parent=1 // pred_fallthru
      _
    // Predicated region
    $region6: #{tpu_custom_call.1} parent=1 // pred_check
      _
    $region7: #{tpu_custom_call.1} parent=1 // pred_check_branch
      %31 = sbr.rel (0) target = $region9
    $region8: #{tpu_custom_call.1} parent=1 // pred_region
      %33 = vsyncadd [#allocation6], 0
      %s34 = sshll.u32 %s1, 4
      %s35 = int_to_ptr.hbm [resolvable:$true] %s34
      %s36 = sshll.u32 [#allocation5], 4
      %s37 = int_to_ptr.vmem [resolvable:$true] %s36
      %42 = dma.hbm_to_vmem [thread:$0]  %s35, 12288, %s37, [#allocation6], 128, 128, 8
    $region9: #{tpu_custom_call.1} parent=1 // pred_fallthru
      _
    // Predicated region
    $region10: #{tpu_custom_call.1} parent=1 // pred_check
      _
    $region11: #{tpu_custom_call.1} parent=1 // pred_check_branch
      %44 = sbr.rel (0) target = $region13
    $region12: #{tpu_custom_call.1} parent=1 // pred_region
      %46 = vsyncadd [#allocation6], 0
      %s48 = sshll.u32 %s2, 4
      %s49 = int_to_ptr.hbm [resolvable:$true] %s48
      %s50 = sshll.u32 [#allocation7], 4
      %s51 = int_to_ptr.vmem [resolvable:$true] %s50
      %53 = dma.hbm_to_vmem [thread:$0]  %s49, 32, %s51, [#allocation6]
    $region13: #{tpu_custom_call.1} parent=1 // pred_fallthru
      _
    // Predicated region
    $region14: #{tpu_custom_call.1} parent=1 // pred_check
      _
    $region15: #{tpu_custom_call.1} parent=1 // pred_check_branch
      %55 = sbr.rel (0) target = $region17
    $region16: #{tpu_custom_call.1} parent=1 // pred_region
      %57 = vsyncadd [#allocation9], 0
      %s58 = sshll.u32 %s3, 4
      %s59 = int_to_ptr.hbm [resolvable:$true] %s58
      %s60 = sshll.u32 [#allocation8], 4
      %s61 = int_to_ptr.vmem [resolvable:$true] %s60
      %66 = dma.hbm_to_vmem [thread:$0]  %s59, 2048, %s61, [#allocation9], 64, 64, 4
    $region17: #{tpu_custom_call.1} parent=1 // pred_fallthru
      _
    // Predicated region
    $region18: #{tpu_custom_call.1} parent=1 // pred_check
      _
    $region19: #{tpu_custom_call.1} parent=1 // pred_check_branch
      %68 = sbr.rel (0) target = $region21
    $region20: #{tpu_custom_call.1} parent=1 // pred_region
      _
    $region21: #{tpu_custom_call.1} parent=1 // pred_fallthru
      _
    // Predicated region
    $region22: #{tpu_custom_call.1} parent=1 // pred_check
      _
    $region23: #{tpu_custom_call.1} parent=1 // pred_check_branch
      %70 = sbr.rel (0) target = $region25
    $region24: #{tpu_custom_call.1} parent=1 // pred_region
      %72 = vsyncadd [#allocation9], 0
      %s73 = sshll.u32 %s5, 4
      %s74 = int_to_ptr.hbm [resolvable:$true] %s73
      %s75 = sshll.u32 [#allocation10], 4
      %s76 = int_to_ptr.vmem [resolvable:$true] %s75
      %81 = dma.hbm_to_vmem [thread:$0]  %s74, 1024, %s76, [#allocation9], 64, 64, 4
    $region25: #{tpu_custom_call.1} parent=1 // pred_fallthru
      _
    // Predicated region
    $region26: #{tpu_custom_call.1} parent=1 // pred_check
      _
    $region27: #{tpu_custom_call.1} parent=1 // pred_check_branch
      %83 = sbr.rel (0) target = $region29
    $region28: #{tpu_custom_call.1} parent=1 // pred_region
      _
    $region29: #{tpu_custom_call.1} parent=1 // pred_fallthru
      _
    // Predicated region
    $region30: #{tpu_custom_call.1} parent=1 // pred_check
      _
    $region31: #{tpu_custom_call.1} parent=1 // pred_check_branch
      %85 = sbr.rel (0) target = $region33
    $region32: #{tpu_custom_call.1} parent=1 // pred_region
      %87 = vsyncadd [#allocation12], 0
      %s88 = sshll.u32 %s7, 4
      %s89 = int_to_ptr.hbm [resolvable:$true] %s88
      %s90 = sshll.u32 [#allocation11], 4
      %s91 = int_to_ptr.vmem [resolvable:$true] %s90
      %96 = dma.hbm_to_vmem [thread:$0]  %s89, 1024, %s91, [#allocation12], 64, 64, 4
    $region33: #{tpu_custom_call.1} parent=1 // pred_fallthru
      _
    // Predicated region
    $region34: #{tpu_custom_call.1} parent=1 // pred_check
      _
    $region35: #{tpu_custom_call.1} parent=1 // pred_check_branch
      %98 = sbr.rel (0) target = $region37
    $region36: #{tpu_custom_call.1} parent=1 // pred_region
      _
    $region37: #{tpu_custom_call.1} parent=1 // pred_fallthru
      _
    // Predicated region
    $region38: #{tpu_custom_call.1} parent=1 // pred_check
      _
    $region39: #{tpu_custom_call.1} parent=1 // pred_check_branch
      %100 = sbr.rel (0) target = $region41
    $region40: #{tpu_custom_call.1} parent=1 // pred_region
      %102 = dma.done [#allocation3], 384
    $region41: #{tpu_custom_call.1} parent=1 // pred_fallthru
      _
    // Predicated region
    $region42: #{tpu_custom_call.1} parent=1 // pred_check
      _
    $region43: #{tpu_custom_call.1} parent=1 // pred_check_branch
      %104 = sbr.rel (0) target = $region45
    $region44: #{tpu_custom_call.1} parent=1 // pred_region
      %106 = dma.done [#allocation6], 12288
    $region45: #{tpu_custom_call.1} parent=1 // pred_fallthru
      _
    // Predicated region
    $region46: #{tpu_custom_call.1} parent=1 // pred_check
      _
    $region47: #{tpu_custom_call.1} parent=1 // pred_check_branch
      %108 = sbr.rel (0) target = $region49
    $region48: #{tpu_custom_call.1} parent=1 // pred_region
      %110 = dma.done [#allocation6], 32
    $region49: #{tpu_custom_call.1} parent=1 // pred_fallthru
      _
    // Predicated region
    $region50: #{tpu_custom_call.1} parent=1 // pred_check
      _
    $region51: #{tpu_custom_call.1} parent=1 // pred_check_branch
      %112 = sbr.rel (0) target = $region53
    $region52: #{tpu_custom_call.1} parent=1 // pred_region
      %114 = dma.done [#allocation9], 2048
    $region53: #{tpu_custom_call.1} parent=1 // pred_fallthru
      _
    // Predicated region
    $region54: #{tpu_custom_call.1} parent=1 // pred_check
      _
    $region55: #{tpu_custom_call.1} parent=1 // pred_check_branch
      %116 = sbr.rel (0) target = $region57
    $region56: #{tpu_custom_call.1} parent=1 // pred_region
      %118 = dma.done [#allocation9], 1024
    $region57: #{tpu_custom_call.1} parent=1 // pred_fallthru
      _
    // Predicated region
    $region58: #{tpu_custom_call.1} parent=1 // pred_check
      _
    $region59: #{tpu_custom_call.1} parent=1 // pred_check_branch
      %120 = sbr.rel (0) target = $region61
    $region60: #{tpu_custom_call.1} parent=1 // pred_region
      %122 = dma.done [#allocation12], 1024
    $region61: #{tpu_custom_call.1} parent=1 // pred_fallthru
      _
    %v123 = vld [vmem:[#allocation2] sm:$0xff]
    %v124 = vld [vmem:[#allocation2 + $0x8] sm:$0xff]
    %v125 = vld [vmem:[#allocation2 + $0x10] sm:$0xff]
    %v126 = vld [vmem:[#allocation5] sm:$0xff]
    %v127 = vld [vmem:[#allocation5 + $0x8] sm:$0xff]
    %v128 = vld [vmem:[#allocation5 + $0x10] sm:$0xff]
    %v129 = vld [vmem:[#allocation5 + $0x18] sm:$0xff]
    %v130 = vld [vmem:[#allocation5 + $0x20] sm:$0xff]
    %v131 = vld [vmem:[#allocation5 + $0x28] sm:$0xff]
    %v132 = vld [vmem:[#allocation5 + $0x30] sm:$0xff]
    %v133 = vld [vmem:[#allocation5 + $0x38] sm:$0xff]
    %v134 = vld [vmem:[#allocation5 + $0x40] sm:$0xff]
    %v135 = vld [vmem:[#allocation5 + $0x48] sm:$0xff]
    %v136 = vld [vmem:[#allocation5 + $0x50] sm:$0xff]
    %v137 = vld [vmem:[#allocation5 + $0x58] sm:$0xff]
    %v138 = vld [vmem:[#allocation5 + $0x60] sm:$0xff]
    %v139 = vld [vmem:[#allocation5 + $0x68] sm:$0xff]
    %v140 = vld [vmem:[#allocation5 + $0x70] sm:$0xff]
    %v141 = vld [vmem:[#allocation5 + $0x78] sm:$0xff]
    %v142 = vld [vmem:[#allocation5 + $0x80] sm:$0xff]
    %v143 = vld [vmem:[#allocation5 + $0x88] sm:$0xff]
    %v144 = vld [vmem:[#allocation5 + $0x90] sm:$0xff]
    %v145 = vld [vmem:[#allocation5 + $0x98] sm:$0xff]
    %v146 = vld [vmem:[#allocation5 + $0xa0] sm:$0xff]
    %v147 = vld [vmem:[#allocation5 + $0xa8] sm:$0xff]
    %v148 = vld [vmem:[#allocation5 + $0xb0] sm:$0xff]
    %v149 = vld [vmem:[#allocation5 + $0xb8] sm:$0xff]
    %v150 = vld [vmem:[#allocation5 + $0xc0] sm:$0xff]
    %v151 = vld [vmem:[#allocation5 + $0xc8] sm:$0xff]
    %v152 = vld [vmem:[#allocation5 + $0xd0] sm:$0xff]
    %v153 = vld [vmem:[#allocation5 + $0xd8] sm:$0xff]
    %v154 = vld [vmem:[#allocation5 + $0xe0] sm:$0xff]
    %v155 = vld [vmem:[#allocation5 + $0xe8] sm:$0xff]
    %v156 = vld [vmem:[#allocation5 + $0xf0] sm:$0xff]
    %v157 = vld [vmem:[#allocation5 + $0xf8] sm:$0xff]
    %v158 = vld [vmem:[#allocation5 + $0x100] sm:$0xff]
    %v159 = vld [vmem:[#allocation5 + $0x108] sm:$0xff]
    %v160 = vld [vmem:[#allocation5 + $0x110] sm:$0xff]
    %v161 = vld [vmem:[#allocation5 + $0x118] sm:$0xff]
    %v162 = vld [vmem:[#allocation5 + $0x120] sm:$0xff]
    %v163 = vld [vmem:[#allocation5 + $0x128] sm:$0xff]
    %v164 = vld [vmem:[#allocation5 + $0x130] sm:$0xff]
    %v165 = vld [vmem:[#allocation5 + $0x138] sm:$0xff]
    %v166 = vld [vmem:[#allocation5 + $0x140] sm:$0xff]
    %v167 = vld [vmem:[#allocation5 + $0x148] sm:$0xff]
    %v168 = vld [vmem:[#allocation5 + $0x150] sm:$0xff]
    %v169 = vld [vmem:[#allocation5 + $0x158] sm:$0xff]
    %v170 = vld [vmem:[#allocation5 + $0x160] sm:$0xff]
    %v171 = vld [vmem:[#allocation5 + $0x168] sm:$0xff]
    %v172 = vld [vmem:[#allocation5 + $0x170] sm:$0xff]
    %v173 = vld [vmem:[#allocation5 + $0x178] sm:$0xff]
    %v174 = vld [vmem:[#allocation5 + $0x180] sm:$0xff]
    %v175 = vld [vmem:[#allocation5 + $0x188] sm:$0xff]
    %v176 = vld [vmem:[#allocation5 + $0x190] sm:$0xff]
    %v177 = vld [vmem:[#allocation5 + $0x198] sm:$0xff]
    %v178 = vld [vmem:[#allocation5 + $0x1a0] sm:$0xff]
    %v179 = vld [vmem:[#allocation5 + $0x1a8] sm:$0xff]
    %v180 = vld [vmem:[#allocation5 + $0x1b0] sm:$0xff]
    %v181 = vld [vmem:[#allocation5 + $0x1b8] sm:$0xff]
    %v182 = vld [vmem:[#allocation5 + $0x1c0] sm:$0xff]
    %v183 = vld [vmem:[#allocation5 + $0x1c8] sm:$0xff]
    %v184 = vld [vmem:[#allocation5 + $0x1d0] sm:$0xff]
    %v185 = vld [vmem:[#allocation5 + $0x1d8] sm:$0xff]
    %v186 = vld [vmem:[#allocation5 + $0x1e0] sm:$0xff]
    %v187 = vld [vmem:[#allocation5 + $0x1e8] sm:$0xff]
    %v188 = vld [vmem:[#allocation5 + $0x1f0] sm:$0xff]
    %v189 = vld [vmem:[#allocation5 + $0x1f8] sm:$0xff]
    %v190 = vld [vmem:[#allocation5 + $0x200] sm:$0xff]
    %v191 = vld [vmem:[#allocation5 + $0x208] sm:$0xff]
    %v192 = vld [vmem:[#allocation5 + $0x210] sm:$0xff]
    %v193 = vld [vmem:[#allocation5 + $0x218] sm:$0xff]
    %v194 = vld [vmem:[#allocation5 + $0x220] sm:$0xff]
    %v195 = vld [vmem:[#allocation5 + $0x228] sm:$0xff]
    %v196 = vld [vmem:[#allocation5 + $0x230] sm:$0xff]
    %v197 = vld [vmem:[#allocation5 + $0x238] sm:$0xff]
    %v198 = vld [vmem:[#allocation5 + $0x240] sm:$0xff]
    %v199 = vld [vmem:[#allocation5 + $0x248] sm:$0xff]
    %v200 = vld [vmem:[#allocation5 + $0x250] sm:$0xff]
    %v201 = vld [vmem:[#allocation5 + $0x258] sm:$0xff]
    %v202 = vld [vmem:[#allocation5 + $0x260] sm:$0xff]
    %v203 = vld [vmem:[#allocation5 + $0x268] sm:$0xff]
    %v204 = vld [vmem:[#allocation5 + $0x270] sm:$0xff]
    %v205 = vld [vmem:[#allocation5 + $0x278] sm:$0xff]
    %v206 = vld [vmem:[#allocation5 + $0x280] sm:$0xff]
    %v207 = vld [vmem:[#allocation5 + $0x288] sm:$0xff]
    %v208 = vld [vmem:[#allocation5 + $0x290] sm:$0xff]
    %v209 = vld [vmem:[#allocation5 + $0x298] sm:$0xff]
    %v210 = vld [vmem:[#allocation5 + $0x2a0] sm:$0xff]
    %v211 = vld [vmem:[#allocation5 + $0x2a8] sm:$0xff]
    %v212 = vld [vmem:[#allocation5 + $0x2b0] sm:$0xff]
    %v213 = vld [vmem:[#allocation5 + $0x2b8] sm:$0xff]
    %v214 = vld [vmem:[#allocation5 + $0x2c0] sm:$0xff]
    %v215 = vld [vmem:[#allocation5 + $0x2c8] sm:$0xff]
    %v216 = vld [vmem:[#allocation5 + $0x2d0] sm:$0xff]
    %v217 = vld [vmem:[#allocation5 + $0x2d8] sm:$0xff]
    %v218 = vld [vmem:[#allocation5 + $0x2e0] sm:$0xff]
    %v219 = vld [vmem:[#allocation5 + $0x2e8] sm:$0xff]
    %v220 = vld [vmem:[#allocation5 + $0x2f0] sm:$0xff]
    %v221 = vld [vmem:[#allocation5 + $0x2f8] sm:$0xff]
    %v222 = vld [vmem:[#allocation7] sm:$0x3]
    %v224 = vperm.slane %v222, 0
    %v225 = vperm.slane %v222, 1
    %v231 = vunpack.c.l.b16 %v123
    %v232 = vunpack.c.h.b16 %v123
    %v233 = vunpack.c.l.b16 %v124
    %v234 = vunpack.c.h.b16 %v124
    %v235 = vunpack.c.l.b16 %v125
    %v236 = vunpack.c.h.b16 %v125
    %v237 = vpack.c.b16 %v231, %v231
    %v238 = vpack.c.b16 %v232, %v232
    %v239 = vpack.c.b16 %v233, %v233
    %v240 = vpack.c.b16 %v234, %v234
    %v241 = vpack.c.b16 %v235, %v235
    %v242 = vpack.c.b16 %v236, %v236
    %v345 = vunpack.c.l.b16 %v126
    %v346 = vunpack.c.h.b16 %v126
    %v347 = vunpack.c.l.b16 %v127
    %v348 = vunpack.c.h.b16 %v127
    %v349 = vunpack.c.l.b16 %v128
    %v350 = vunpack.c.h.b16 %v128
    %v351 = vunpack.c.l.b16 %v129
    %v352 = vunpack.c.h.b16 %v129
    %v353 = vunpack.c.l.b16 %v130
    %v354 = vunpack.c.h.b16 %v130
    %v355 = vunpack.c.l.b16 %v131
    %v356 = vunpack.c.h.b16 %v131
    %v357 = vunpack.c.l.b16 %v132
    %v358 = vunpack.c.h.b16 %v132
    %v359 = vunpack.c.l.b16 %v133
    %v360 = vunpack.c.h.b16 %v133
    %v361 = vunpack.c.l.b16 %v134
    %v362 = vunpack.c.h.b16 %v134
    %v363 = vunpack.c.l.b16 %v135
    %v364 = vunpack.c.h.b16 %v135
    %v365 = vunpack.c.l.b16 %v136
    %v366 = vunpack.c.h.b16 %v136
    %v367 = vunpack.c.l.b16 %v137
    %v368 = vunpack.c.h.b16 %v137
    %v369 = vunpack.c.l.b16 %v138
    %v370 = vunpack.c.h.b16 %v138
    %v371 = vunpack.c.l.b16 %v139
    %v372 = vunpack.c.h.b16 %v139
    %v373 = vunpack.c.l.b16 %v140
    %v374 = vunpack.c.h.b16 %v140
    %v375 = vunpack.c.l.b16 %v141
    %v376 = vunpack.c.h.b16 %v141
    %v377 = vunpack.c.l.b16 %v142
    %v378 = vunpack.c.h.b16 %v142
    %v379 = vunpack.c.l.b16 %v143
    %v380 = vunpack.c.h.b16 %v143
    %v381 = vunpack.c.l.b16 %v144
    %v382 = vunpack.c.h.b16 %v144
    %v383 = vunpack.c.l.b16 %v145
    %v384 = vunpack.c.h.b16 %v145
    %v385 = vunpack.c.l.b16 %v146
    %v386 = vunpack.c.h.b16 %v146
    %v387 = vunpack.c.l.b16 %v147
    %v388 = vunpack.c.h.b16 %v147
    %v389 = vunpack.c.l.b16 %v148
    %v390 = vunpack.c.h.b16 %v148
    %v391 = vunpack.c.l.b16 %v149
    %v392 = vunpack.c.h.b16 %v149
    %v393 = vunpack.c.l.b16 %v150
    %v394 = vunpack.c.h.b16 %v150
    %v395 = vunpack.c.l.b16 %v151
    %v396 = vunpack.c.h.b16 %v151
    %v397 = vunpack.c.l.b16 %v152
    %v398 = vunpack.c.h.b16 %v152
    %v399 = vunpack.c.l.b16 %v153
    %v400 = vunpack.c.h.b16 %v153
    %v401 = vunpack.c.l.b16 %v154
    %v402 = vunpack.c.h.b16 %v154
    %v403 = vunpack.c.l.b16 %v155
    %v404 = vunpack.c.h.b16 %v155
    %v405 = vunpack.c.l.b16 %v156
    %v406 = vunpack.c.h.b16 %v156
    %v407 = vunpack.c.l.b16 %v157
    %v408 = vunpack.c.h.b16 %v157
    %v409 = vunpack.c.l.b16 %v158
    %v410 = vunpack.c.h.b16 %v158
    %v411 = vunpack.c.l.b16 %v159
    %v412 = vunpack.c.h.b16 %v159
    %v413 = vunpack.c.l.b16 %v160
    %v414 = vunpack.c.h.b16 %v160
    %v415 = vunpack.c.l.b16 %v161
    %v416 = vunpack.c.h.b16 %v161
    %v417 = vunpack.c.l.b16 %v162
    %v418 = vunpack.c.h.b16 %v162
    %v419 = vunpack.c.l.b16 %v163
    %v420 = vunpack.c.h.b16 %v163
    %v421 = vunpack.c.l.b16 %v164
    %v422 = vunpack.c.h.b16 %v164
    %v423 = vunpack.c.l.b16 %v165
    %v424 = vunpack.c.h.b16 %v165
    %v425 = vunpack.c.l.b16 %v166
    %v426 = vunpack.c.h.b16 %v166
    %v427 = vunpack.c.l.b16 %v167
    %v428 = vunpack.c.h.b16 %v167
    %v429 = vunpack.c.l.b16 %v168
    %v430 = vunpack.c.h.b16 %v168
    %v431 = vunpack.c.l.b16 %v169
    %v432 = vunpack.c.h.b16 %v169
    %v433 = vunpack.c.l.b16 %v170
    %v434 = vunpack.c.h.b16 %v170
    %v435 = vunpack.c.l.b16 %v171
    %v436 = vunpack.c.h.b16 %v171
    %v437 = vunpack.c.l.b16 %v172
    %v438 = vunpack.c.h.b16 %v172
    %v439 = vunpack.c.l.b16 %v173
    %v440 = vunpack.c.h.b16 %v173
    %v441 = vunpack.c.l.b16 %v174
    %v442 = vunpack.c.h.b16 %v174
    %v443 = vunpack.c.l.b16 %v175
    %v444 = vunpack.c.h.b16 %v175
    %v445 = vunpack.c.l.b16 %v176
    %v446 = vunpack.c.h.b16 %v176
    %v447 = vunpack.c.l.b16 %v177
    %v448 = vunpack.c.h.b16 %v177
    %v449 = vunpack.c.l.b16 %v178
    %v450 = vunpack.c.h.b16 %v178
    %v451 = vunpack.c.l.b16 %v179
    %v452 = vunpack.c.h.b16 %v179
    %v453 = vunpack.c.l.b16 %v180
    %v454 = vunpack.c.h.b16 %v180
    %v455 = vunpack.c.l.b16 %v181
    %v456 = vunpack.c.h.b16 %v181
    %v457 = vunpack.c.l.b16 %v182
    %v458 = vunpack.c.h.b16 %v182
    %v459 = vunpack.c.l.b16 %v183
    %v460 = vunpack.c.h.b16 %v183
    %v461 = vunpack.c.l.b16 %v184
    %v462 = vunpack.c.h.b16 %v184
    %v463 = vunpack.c.l.b16 %v185
    %v464 = vunpack.c.h.b16 %v185
    %v465 = vunpack.c.l.b16 %v186
    %v466 = vunpack.c.h.b16 %v186
    %v467 = vunpack.c.l.b16 %v187
    %v468 = vunpack.c.h.b16 %v187
    %v469 = vunpack.c.l.b16 %v188
    %v470 = vunpack.c.h.b16 %v188
    %v471 = vunpack.c.l.b16 %v189
    %v472 = vunpack.c.h.b16 %v189
    %v473 = vunpack.c.l.b16 %v190
    %v474 = vunpack.c.h.b16 %v190
    %v475 = vunpack.c.l.b16 %v191
    %v476 = vunpack.c.h.b16 %v191
    %v477 = vunpack.c.l.b16 %v192
    %v478 = vunpack.c.h.b16 %v192
    %v479 = vunpack.c.l.b16 %v193
    %v480 = vunpack.c.h.b16 %v193
    %v481 = vunpack.c.l.b16 %v194
    %v482 = vunpack.c.h.b16 %v194
    %v483 = vunpack.c.l.b16 %v195
    %v484 = vunpack.c.h.b16 %v195
    %v485 = vunpack.c.l.b16 %v196
    %v486 = vunpack.c.h.b16 %v196
    %v487 = vunpack.c.l.b16 %v197
    %v488 = vunpack.c.h.b16 %v197
    %v489 = vunpack.c.l.b16 %v198
    %v490 = vunpack.c.h.b16 %v198
    %v491 = vunpack.c.l.b16 %v199
    %v492 = vunpack.c.h.b16 %v199
    %v493 = vunpack.c.l.b16 %v200
    %v494 = vunpack.c.h.b16 %v200
    %v495 = vunpack.c.l.b16 %v201
    %v496 = vunpack.c.h.b16 %v201
    %v497 = vunpack.c.l.b16 %v202
    %v498 = vunpack.c.h.b16 %v202
    %v499 = vunpack.c.l.b16 %v203
    %v500 = vunpack.c.h.b16 %v203
    %v501 = vunpack.c.l.b16 %v204
    %v502 = vunpack.c.h.b16 %v204
    %v503 = vunpack.c.l.b16 %v205
    %v504 = vunpack.c.h.b16 %v205
    %v505 = vunpack.c.l.b16 %v206
    %v506 = vunpack.c.h.b16 %v206
    %v507 = vunpack.c.l.b16 %v207
    %v508 = vunpack.c.h.b16 %v207
    %v509 = vunpack.c.l.b16 %v208
    %v510 = vunpack.c.h.b16 %v208
    %v511 = vunpack.c.l.b16 %v209
    %v512 = vunpack.c.h.b16 %v209
    %v513 = vunpack.c.l.b16 %v210
    %v514 = vunpack.c.h.b16 %v210
    %v515 = vunpack.c.l.b16 %v211
    %v516 = vunpack.c.h.b16 %v211
    %v517 = vunpack.c.l.b16 %v212
    %v518 = vunpack.c.h.b16 %v212
    %v519 = vunpack.c.l.b16 %v213
    %v520 = vunpack.c.h.b16 %v213
    %v521 = vunpack.c.l.b16 %v214
    %v522 = vunpack.c.h.b16 %v214
    %v523 = vunpack.c.l.b16 %v215
    %v524 = vunpack.c.h.b16 %v215
    %v525 = vunpack.c.l.b16 %v216
    %v526 = vunpack.c.h.b16 %v216
    %v527 = vunpack.c.l.b16 %v217
    %v528 = vunpack.c.h.b16 %v217
    %v529 = vunpack.c.l.b16 %v218
    %v530 = vunpack.c.h.b16 %v218
    %v531 = vunpack.c.l.b16 %v219
    %v532 = vunpack.c.h.b16 %v219
    %v533 = vunpack.c.l.b16 %v220
    %v534 = vunpack.c.h.b16 %v220
    %v535 = vunpack.c.l.b16 %v221
    %v536 = vunpack.c.h.b16 %v221
    %v537 = vpack.c.b16 %v347, %v345
    %v538 = vpack.c.b16 %v348, %v346
    %v539 = vpack.c.b16 %v351, %v349
    %v540 = vpack.c.b16 %v352, %v350
    %v541 = vpack.c.b16 %v355, %v353
    %v542 = vpack.c.b16 %v356, %v354
    %v543 = vpack.c.b16 %v359, %v357
    %v544 = vpack.c.b16 %v360, %v358
    %v545 = vpack.c.b16 %v363, %v361
    %v546 = vpack.c.b16 %v364, %v362
    %v547 = vpack.c.b16 %v367, %v365
    %v548 = vpack.c.b16 %v368, %v366
    %v549 = vpack.c.b16 %v371, %v369
    %v550 = vpack.c.b16 %v372, %v370
    %v551 = vpack.c.b16 %v375, %v373
    %v552 = vpack.c.b16 %v376, %v374
    %v553 = vpack.c.b16 %v379, %v377
    %v554 = vpack.c.b16 %v380, %v378
    %v555 = vpack.c.b16 %v383, %v381
    %v556 = vpack.c.b16 %v384, %v382
    %v557 = vpack.c.b16 %v387, %v385
    %v558 = vpack.c.b16 %v388, %v386
    %v559 = vpack.c.b16 %v391, %v389
    %v560 = vpack.c.b16 %v392, %v390
    %v561 = vpack.c.b16 %v395, %v393
    %v562 = vpack.c.b16 %v396, %v394
    %v563 = vpack.c.b16 %v399, %v397
    %v564 = vpack.c.b16 %v400, %v398
    %v565 = vpack.c.b16 %v403, %v401
    %v566 = vpack.c.b16 %v404, %v402
    %v567 = vpack.c.b16 %v407, %v405
    %v568 = vpack.c.b16 %v408, %v406
    %v569 = vpack.c.b16 %v411, %v409
    %v570 = vpack.c.b16 %v412, %v410
    %v571 = vpack.c.b16 %v415, %v413
    %v572 = vpack.c.b16 %v416, %v414
    %v573 = vpack.c.b16 %v419, %v417
    %v574 = vpack.c.b16 %v420, %v418
    %v575 = vpack.c.b16 %v423, %v421
    %v576 = vpack.c.b16 %v424, %v422
    %v577 = vpack.c.b16 %v427, %v425
    %v578 = vpack.c.b16 %v428, %v426
    %v579 = vpack.c.b16 %v431, %v429
    %v580 = vpack.c.b16 %v432, %v430
    %v581 = vpack.c.b16 %v435, %v433
    %v582 = vpack.c.b16 %v436, %v434
    %v583 = vpack.c.b16 %v439, %v437
    %v584 = vpack.c.b16 %v440, %v438
    %v585 = vpack.c.b16 %v443, %v441
    %v586 = vpack.c.b16 %v444, %v442
    %v587 = vpack.c.b16 %v447, %v445
    %v588 = vpack.c.b16 %v448, %v446
    %v589 = vpack.c.b16 %v451, %v449
    %v590 = vpack.c.b16 %v452, %v450
    %v591 = vpack.c.b16 %v455, %v453
    %v592 = vpack.c.b16 %v456, %v454
    %v593 = vpack.c.b16 %v459, %v457
    %v594 = vpack.c.b16 %v460, %v458
    %v595 = vpack.c.b16 %v463, %v461
    %v596 = vpack.c.b16 %v464, %v462
    %v597 = vpack.c.b16 %v467, %v465
    %v598 = vpack.c.b16 %v468, %v466
    %v599 = vpack.c.b16 %v471, %v469
    %v600 = vpack.c.b16 %v472, %v470
    %v601 = vpack.c.b16 %v475, %v473
    %v602 = vpack.c.b16 %v476, %v474
    %v603 = vpack.c.b16 %v479, %v477
    %v604 = vpack.c.b16 %v480, %v478
    %v605 = vpack.c.b16 %v483, %v481
    %v606 = vpack.c.b16 %v484, %v482
    %v607 = vpack.c.b16 %v487, %v485
    %v608 = vpack.c.b16 %v488, %v486
    %v609 = vpack.c.b16 %v491, %v489
    %v610 = vpack.c.b16 %v492, %v490
    %v611 = vpack.c.b16 %v495, %v493
    %v612 = vpack.c.b16 %v496, %v494
    %v613 = vpack.c.b16 %v499, %v497
    %v614 = vpack.c.b16 %v500, %v498
    %v615 = vpack.c.b16 %v503, %v501
    %v616 = vpack.c.b16 %v504, %v502
    %v617 = vpack.c.b16 %v507, %v505
    %v618 = vpack.c.b16 %v508, %v506
    %v619 = vpack.c.b16 %v511, %v509
    %v620 = vpack.c.b16 %v512, %v510
    %v621 = vpack.c.b16 %v515, %v513
    %v622 = vpack.c.b16 %v516, %v514
    %v623 = vpack.c.b16 %v519, %v517
    %v624 = vpack.c.b16 %v520, %v518
    %v625 = vpack.c.b16 %v523, %v521
    %v626 = vpack.c.b16 %v524, %v522
    %v627 = vpack.c.b16 %v527, %v525
    %v628 = vpack.c.b16 %v528, %v526
    %v629 = vpack.c.b16 %v531, %v529
    %v630 = vpack.c.b16 %v532, %v530
    %v631 = vpack.c.b16 %v535, %v533
    %v632 = vpack.c.b16 %v536, %v534
    %729 = vmatpush.bf16.msra.mxu0 %v551
    %730 = vmatpush.bf16.msra.mxu0 %v549
    %731 = vmatpush.bf16.msra.mxu0 %v547
    %732 = vmatpush.bf16.msra.mxu0 %v545
    %733 = vmatpush.bf16.msra.mxu0 %v543
    %734 = vmatpush.bf16.msra.mxu0 %v541
    %735 = vmatpush.bf16.msra.mxu0 %v539
    %736 = vmatpush.bf16.msra.mxu0 %v537
    %737 = vmatmul.bf16.gmra.mxu0 %v237
    %v738 = vpop.f32.mrf.mxu0
    %v739 = vadd.f32 %v224, %v738
    %v740 = vpop.f32.mrf.mxu0
    %741 = vdwg.mxu0
    %742 = vmatpush.bf16.msra.mxu0 %v567
    %743 = vmatpush.bf16.msra.mxu0 %v565
    %744 = vmatpush.bf16.msra.mxu0 %v563
    %745 = vmatpush.bf16.msra.mxu0 %v561
    %746 = vmatpush.bf16.msra.mxu0 %v559
    %747 = vmatpush.bf16.msra.mxu0 %v557
    %748 = vmatpush.bf16.msra.mxu0 %v555
    %749 = vmatpush.bf16.msra.mxu0 %v553
    %750 = vmatmul.bf16.gmra.mxu0 %v238
    %v751 = vpop.f32.mrf.mxu0
    %v752 = vadd.f32 %v739, %v751
    %v753 = vpop.f32.mrf.mxu0
    %754 = vdwg.mxu0
    %755 = vmatpush.bf16.msra.mxu0 %v583
    %756 = vmatpush.bf16.msra.mxu0 %v581
    %757 = vmatpush.bf16.msra.mxu0 %v579
    %758 = vmatpush.bf16.msra.mxu0 %v577
    %759 = vmatpush.bf16.msra.mxu0 %v575
    %760 = vmatpush.bf16.msra.mxu0 %v573
    %761 = vmatpush.bf16.msra.mxu0 %v571
    %762 = vmatpush.bf16.msra.mxu0 %v569
    %763 = vmatmul.bf16.gmra.mxu0 %v239
    %v764 = vpop.f32.mrf.mxu0
    %v765 = vadd.f32 %v752, %v764
    %v766 = vpop.f32.mrf.mxu0
    %767 = vdwg.mxu0
    %768 = vmatpush.bf16.msra.mxu0 %v599
    %769 = vmatpush.bf16.msra.mxu0 %v597
    %770 = vmatpush.bf16.msra.mxu0 %v595
    %771 = vmatpush.bf16.msra.mxu0 %v593
    %772 = vmatpush.bf16.msra.mxu0 %v591
    %773 = vmatpush.bf16.msra.mxu0 %v589
    %774 = vmatpush.bf16.msra.mxu0 %v587
    %775 = vmatpush.bf16.msra.mxu0 %v585
    %776 = vmatmul.bf16.gmra.mxu0 %v240
    %v777 = vpop.f32.mrf.mxu0
    %v778 = vadd.f32 %v765, %v777
    %v779 = vpop.f32.mrf.mxu0
    %780 = vdwg.mxu0
    %781 = vmatpush.bf16.msra.mxu0 %v615
    %782 = vmatpush.bf16.msra.mxu0 %v613
    %783 = vmatpush.bf16.msra.mxu0 %v611
    %784 = vmatpush.bf16.msra.mxu0 %v609
    %785 = vmatpush.bf16.msra.mxu0 %v607
    %786 = vmatpush.bf16.msra.mxu0 %v605
    %787 = vmatpush.bf16.msra.mxu0 %v603
    %788 = vmatpush.bf16.msra.mxu0 %v601
    %789 = vmatmul.bf16.gmra.mxu0 %v241
    %v790 = vpop.f32.mrf.mxu0
    %v791 = vadd.f32 %v778, %v790
    %v792 = vpop.f32.mrf.mxu0
    %793 = vdwg.mxu0
    %794 = vmatpush.bf16.msra.mxu0 %v631
    %795 = vmatpush.bf16.msra.mxu0 %v629
    %796 = vmatpush.bf16.msra.mxu0 %v627
    %797 = vmatpush.bf16.msra.mxu0 %v625
    %798 = vmatpush.bf16.msra.mxu0 %v623
    %799 = vmatpush.bf16.msra.mxu0 %v621
    %800 = vmatpush.bf16.msra.mxu0 %v619
    %801 = vmatpush.bf16.msra.mxu0 %v617
    %802 = vmatmul.bf16.gmra.mxu0 %v242
    %v803 = vpop.f32.mrf.mxu0
    %v804 = vadd.f32 %v791, %v803
    %v805 = vpop.f32.mrf.mxu0
    %806 = vdwg.mxu0
    %807 = vmatpush.bf16.msra.mxu0 %v552
    %808 = vmatpush.bf16.msra.mxu0 %v550
    %809 = vmatpush.bf16.msra.mxu0 %v548
    %810 = vmatpush.bf16.msra.mxu0 %v546
    %811 = vmatpush.bf16.msra.mxu0 %v544
    %812 = vmatpush.bf16.msra.mxu0 %v542
    %813 = vmatpush.bf16.msra.mxu0 %v540
    %814 = vmatpush.bf16.msra.mxu0 %v538
    %815 = vmatmul.bf16.gmra.mxu0 %v237
    %v816 = vpop.f32.mrf.mxu0
    %v817 = vadd.f32 %v225, %v816
    %v818 = vpop.f32.mrf.mxu0
    %819 = vdwg.mxu0
    %820 = vmatpush.bf16.msra.mxu0 %v568
    %821 = vmatpush.bf16.msra.mxu0 %v566
    %822 = vmatpush.bf16.msra.mxu0 %v564
    %823 = vmatpush.bf16.msra.mxu0 %v562
    %824 = vmatpush.bf16.msra.mxu0 %v560
    %825 = vmatpush.bf16.msra.mxu0 %v558
    %826 = vmatpush.bf16.msra.mxu0 %v556
    %827 = vmatpush.bf16.msra.mxu0 %v554
    %828 = vmatmul.bf16.gmra.mxu0 %v238
    %v829 = vpop.f32.mrf.mxu0
    %v830 = vadd.f32 %v817, %v829
    %v831 = vpop.f32.mrf.mxu0
    %832 = vdwg.mxu0
    %833 = vmatpush.bf16.msra.mxu0 %v584
    %834 = vmatpush.bf16.msra.mxu0 %v582
    %835 = vmatpush.bf16.msra.mxu0 %v580
    %836 = vmatpush.bf16.msra.mxu0 %v578
    %837 = vmatpush.bf16.msra.mxu0 %v576
    %838 = vmatpush.bf16.msra.mxu0 %v574
    %839 = vmatpush.bf16.msra.mxu0 %v572
    %840 = vmatpush.bf16.msra.mxu0 %v570
    %841 = vmatmul.bf16.gmra.mxu0 %v239
    %v842 = vpop.f32.mrf.mxu0
    %v843 = vadd.f32 %v830, %v842
    %v844 = vpop.f32.mrf.mxu0
    %845 = vdwg.mxu0
    %846 = vmatpush.bf16.msra.mxu0 %v600
    %847 = vmatpush.bf16.msra.mxu0 %v598
    %848 = vmatpush.bf16.msra.mxu0 %v596
    %849 = vmatpush.bf16.msra.mxu0 %v594
    %850 = vmatpush.bf16.msra.mxu0 %v592
    %851 = vmatpush.bf16.msra.mxu0 %v590
    %852 = vmatpush.bf16.msra.mxu0 %v588
    %853 = vmatpush.bf16.msra.mxu0 %v586
    %854 = vmatmul.bf16.gmra.mxu0 %v240
    %v855 = vpop.f32.mrf.mxu0
    %v856 = vadd.f32 %v843, %v855
    %v857 = vpop.f32.mrf.mxu0
    %858 = vdwg.mxu0
    %859 = vmatpush.bf16.msra.mxu0 %v616
    %860 = vmatpush.bf16.msra.mxu0 %v614
    %861 = vmatpush.bf16.msra.mxu0 %v612
    %862 = vmatpush.bf16.msra.mxu0 %v610
    %863 = vmatpush.bf16.msra.mxu0 %v608
    %864 = vmatpush.bf16.msra.mxu0 %v606
    %865 = vmatpush.bf16.msra.mxu0 %v604
    %866 = vmatpush.bf16.msra.mxu0 %v602
    %867 = vmatmul.bf16.gmra.mxu0 %v241
    %v868 = vpop.f32.mrf.mxu0
    %v869 = vadd.f32 %v856, %v868
    %v870 = vpop.f32.mrf.mxu0
    %871 = vdwg.mxu0
    %872 = vmatpush.bf16.msra.mxu0 %v632
    %873 = vmatpush.bf16.msra.mxu0 %v630
    %874 = vmatpush.bf16.msra.mxu0 %v628
    %875 = vmatpush.bf16.msra.mxu0 %v626
    %876 = vmatpush.bf16.msra.mxu0 %v624
    %877 = vmatpush.bf16.msra.mxu0 %v622
    %878 = vmatpush.bf16.msra.mxu0 %v620
    %879 = vmatpush.bf16.msra.mxu0 %v618
    %880 = vmatmul.bf16.gmra.mxu0 %v242
    %v881 = vpop.f32.mrf.mxu0
    %v882 = vadd.f32 %v869, %v881
    %v883 = vpop.f32.mrf.mxu0
    %884 = vdwg.mxu0
    %v885 = vmax.f32 %v804, 0.0
    %v886 = vmax.f32 %v882, 0.0
    %v887 = vpack.c.bf16 %v885, %v885
    %v888 = vpack.c.bf16 %v886, %v886
    %v889 = vld [vmem:[#allocation8] sm:$0xf]
    %v890 = vld [vmem:[#allocation8 + $0x4] sm:$0xf]
    %v891 = vld [vmem:[#allocation8 + $0x8] sm:$0xf]
    %v892 = vld [vmem:[#allocation8 + $0xc] sm:$0xf]
    %v893 = vld [vmem:[#allocation8 + $0x10] sm:$0xf]
    %v894 = vld [vmem:[#allocation8 + $0x14] sm:$0xf]
    %v895 = vld [vmem:[#allocation8 + $0x18] sm:$0xf]
    %v896 = vld [vmem:[#allocation8 + $0x1c] sm:$0xf]
    %v897 = vld [vmem:[#allocation8 + $0x20] sm:$0xf]
    %v898 = vld [vmem:[#allocation8 + $0x24] sm:$0xf]
    %v899 = vld [vmem:[#allocation8 + $0x28] sm:$0xf]
    %v900 = vld [vmem:[#allocation8 + $0x2c] sm:$0xf]
    %v901 = vld [vmem:[#allocation8 + $0x30] sm:$0xf]
    %v902 = vld [vmem:[#allocation8 + $0x34] sm:$0xf]
    %v903 = vld [vmem:[#allocation8 + $0x38] sm:$0xf]
    %v904 = vld [vmem:[#allocation8 + $0x3c] sm:$0xf]
    %v905 = vld [vmem:[#allocation8 + $0x40] sm:$0xf]
    %v906 = vld [vmem:[#allocation8 + $0x44] sm:$0xf]
    %v907 = vld [vmem:[#allocation8 + $0x48] sm:$0xf]
    %v908 = vld [vmem:[#allocation8 + $0x4c] sm:$0xf]
    %v909 = vld [vmem:[#allocation8 + $0x50] sm:$0xf]
    %v910 = vld [vmem:[#allocation8 + $0x54] sm:$0xf]
    %v911 = vld [vmem:[#allocation8 + $0x58] sm:$0xf]
    %v912 = vld [vmem:[#allocation8 + $0x5c] sm:$0xf]
    %v913 = vld [vmem:[#allocation8 + $0x60] sm:$0xf]
    %v914 = vld [vmem:[#allocation8 + $0x64] sm:$0xf]
    %v915 = vld [vmem:[#allocation8 + $0x68] sm:$0xf]
    %v916 = vld [vmem:[#allocation8 + $0x6c] sm:$0xf]
    %v917 = vld [vmem:[#allocation8 + $0x70] sm:$0xf]
    %v918 = vld [vmem:[#allocation8 + $0x74] sm:$0xf]
    %v919 = vld [vmem:[#allocation8 + $0x78] sm:$0xf]
    %v920 = vld [vmem:[#allocation8 + $0x7c] sm:$0xf]
    %v921 = vld [vmem:[%s4] sm:$0x1]
    %v923 = vperm.slane %v921, 0
    %v957 = vunpack.c.l.b16 %v889
    %v958 = vunpack.c.l.b16 %v890
    %v959 = vunpack.c.l.b16 %v891
    %v960 = vunpack.c.l.b16 %v892
    %v961 = vunpack.c.l.b16 %v893
    %v962 = vunpack.c.l.b16 %v894
    %v963 = vunpack.c.l.b16 %v895
    %v964 = vunpack.c.l.b16 %v896
    %v965 = vunpack.c.l.b16 %v897
    %v966 = vunpack.c.l.b16 %v898
    %v967 = vunpack.c.l.b16 %v899
    %v968 = vunpack.c.l.b16 %v900
    %v969 = vunpack.c.l.b16 %v901
    %v970 = vunpack.c.l.b16 %v902
    %v971 = vunpack.c.l.b16 %v903
    %v972 = vunpack.c.l.b16 %v904
    %v973 = vunpack.c.l.b16 %v905
    %v974 = vunpack.c.l.b16 %v906
    %v975 = vunpack.c.l.b16 %v907
    %v976 = vunpack.c.l.b16 %v908
    %v977 = vunpack.c.l.b16 %v909
    %v978 = vunpack.c.l.b16 %v910
    %v979 = vunpack.c.l.b16 %v911
    %v980 = vunpack.c.l.b16 %v912
    %v981 = vunpack.c.l.b16 %v913
    %v982 = vunpack.c.l.b16 %v914
    %v983 = vunpack.c.l.b16 %v915
    %v984 = vunpack.c.l.b16 %v916
    %v985 = vunpack.c.l.b16 %v917
    %v986 = vunpack.c.l.b16 %v918
    %v987 = vunpack.c.l.b16 %v919
    %v988 = vunpack.c.l.b16 %v920
    %v989 = vpack.c.b16 %v958, %v957
    %v990 = vpack.c.b16 %v960, %v959
    %v991 = vpack.c.b16 %v962, %v961
    %v992 = vpack.c.b16 %v964, %v963
    %v993 = vpack.c.b16 %v966, %v965
    %v994 = vpack.c.b16 %v968, %v967
    %v995 = vpack.c.b16 %v970, %v969
    %v996 = vpack.c.b16 %v972, %v971
    %v997 = vpack.c.b16 %v974, %v973
    %v998 = vpack.c.b16 %v976, %v975
    %v999 = vpack.c.b16 %v978, %v977
    %v1000 = vpack.c.b16 %v980, %v979
    %v1001 = vpack.c.b16 %v982, %v981
    %v1002 = vpack.c.b16 %v984, %v983
    %v1003 = vpack.c.b16 %v986, %v985
    %v1004 = vpack.c.b16 %v988, %v987
    %1021 = vmatpush.bf16.msra.mxu0 %v996
    %1022 = vmatpush.bf16.msra.mxu0 %v995
    %1023 = vmatpush.bf16.msra.mxu0 %v994
    %1024 = vmatpush.bf16.msra.mxu0 %v993
    %1025 = vmatpush.bf16.msra.mxu0 %v992
    %1026 = vmatpush.bf16.msra.mxu0 %v991
    %1027 = vmatpush.bf16.msra.mxu0 %v990
    %1028 = vmatpush.bf16.msra.mxu0 %v989
    %1029 = vmatmul.bf16.gmra.mxu0 %v887
    %v1030 = vpop.f32.mrf.mxu0
    %v1031 = vadd.f32 %v923, %v1030
    %v1032 = vpop.f32.mrf.mxu0
    %1033 = vdwg.mxu0
    %1034 = vmatpush.bf16.msra.mxu0 %v1004
    %1035 = vmatpush.bf16.msra.mxu0 %v1003
    %1036 = vmatpush.bf16.msra.mxu0 %v1002
    %1037 = vmatpush.bf16.msra.mxu0 %v1001
    %1038 = vmatpush.bf16.msra.mxu0 %v1000
    %1039 = vmatpush.bf16.msra.mxu0 %v999
    %1040 = vmatpush.bf16.msra.mxu0 %v998
    %1041 = vmatpush.bf16.msra.mxu0 %v997
    %1042 = vmatmul.bf16.gmra.mxu0 %v888
    %v1043 = vpop.f32.mrf.mxu0
    %v1044 = vadd.f32 %v1031, %v1043
    %v1045 = vpop.f32.mrf.mxu0
    %1046 = vdwg.mxu0
    %v1047 = vmax.f32 %v1044, 0.0
    %v1048 = vpack.c.bf16 %v1047, %v1047
    %v1049 = vld [vmem:[#allocation10] sm:$0xf]
    %v1050 = vld [vmem:[#allocation10 + $0x4] sm:$0xf]
    %v1051 = vld [vmem:[#allocation10 + $0x8] sm:$0xf]
    %v1052 = vld [vmem:[#allocation10 + $0xc] sm:$0xf]
    %v1053 = vld [vmem:[#allocation10 + $0x10] sm:$0xf]
    %v1054 = vld [vmem:[#allocation10 + $0x14] sm:$0xf]
    %v1055 = vld [vmem:[#allocation10 + $0x18] sm:$0xf]
    %v1056 = vld [vmem:[#allocation10 + $0x1c] sm:$0xf]
    %v1057 = vld [vmem:[#allocation10 + $0x20] sm:$0xf]
    %v1058 = vld [vmem:[#allocation10 + $0x24] sm:$0xf]
    %v1059 = vld [vmem:[#allocation10 + $0x28] sm:$0xf]
    %v1060 = vld [vmem:[#allocation10 + $0x2c] sm:$0xf]
    %v1061 = vld [vmem:[#allocation10 + $0x30] sm:$0xf]
    %v1062 = vld [vmem:[#allocation10 + $0x34] sm:$0xf]
    %v1063 = vld [vmem:[#allocation10 + $0x38] sm:$0xf]
    %v1064 = vld [vmem:[#allocation10 + $0x3c] sm:$0xf]
    %v1065 = vld [vmem:[%s6] sm:$0x1]
    %v1067 = vperm.slane %v1065, 0
    %v1085 = vunpack.c.l.b16 %v1049
    %v1086 = vunpack.c.l.b16 %v1050
    %v1087 = vunpack.c.l.b16 %v1051
    %v1088 = vunpack.c.l.b16 %v1052
    %v1089 = vunpack.c.l.b16 %v1053
    %v1090 = vunpack.c.l.b16 %v1054
    %v1091 = vunpack.c.l.b16 %v1055
    %v1092 = vunpack.c.l.b16 %v1056
    %v1093 = vunpack.c.l.b16 %v1057
    %v1094 = vunpack.c.l.b16 %v1058
    %v1095 = vunpack.c.l.b16 %v1059
    %v1096 = vunpack.c.l.b16 %v1060
    %v1097 = vunpack.c.l.b16 %v1061
    %v1098 = vunpack.c.l.b16 %v1062
    %v1099 = vunpack.c.l.b16 %v1063
    %v1100 = vunpack.c.l.b16 %v1064
    %v1101 = vpack.c.b16 %v1086, %v1085
    %v1102 = vpack.c.b16 %v1088, %v1087
    %v1103 = vpack.c.b16 %v1090, %v1089
    %v1104 = vpack.c.b16 %v1092, %v1091
    %v1105 = vpack.c.b16 %v1094, %v1093
    %v1106 = vpack.c.b16 %v1096, %v1095
    %v1107 = vpack.c.b16 %v1098, %v1097
    %v1108 = vpack.c.b16 %v1100, %v1099
    %1117 = vmatpush.bf16.msra.mxu0 %v1108
    %1118 = vmatpush.bf16.msra.mxu0 %v1107
    %1119 = vmatpush.bf16.msra.mxu0 %v1106
    %1120 = vmatpush.bf16.msra.mxu0 %v1105
    %1121 = vmatpush.bf16.msra.mxu0 %v1104
    %1122 = vmatpush.bf16.msra.mxu0 %v1103
    %1123 = vmatpush.bf16.msra.mxu0 %v1102
    %1124 = vmatpush.bf16.msra.mxu0 %v1101
    %1125 = vmatmul.bf16.gmra.mxu0 %v1048
    %v1126 = vpop.f32.mrf.mxu0
    %v1127 = vadd.f32 %v1067, %v1126
    %v1128 = vpop.f32.mrf.mxu0
    %1129 = vdwg.mxu0
    %v1130 = vmax.f32 %v1127, 0.0
    %v1131 = vpack.c.bf16 %v1130, %v1130
    %v1132 = vld [vmem:[#allocation11] sm:$0xf]
    %v1133 = vld [vmem:[#allocation11 + $0x4] sm:$0xf]
    %v1134 = vld [vmem:[#allocation11 + $0x8] sm:$0xf]
    %v1135 = vld [vmem:[#allocation11 + $0xc] sm:$0xf]
    %v1136 = vld [vmem:[#allocation11 + $0x10] sm:$0xf]
    %v1137 = vld [vmem:[#allocation11 + $0x14] sm:$0xf]
    %v1138 = vld [vmem:[#allocation11 + $0x18] sm:$0xf]
    %v1139 = vld [vmem:[#allocation11 + $0x1c] sm:$0xf]
    %v1140 = vld [vmem:[#allocation11 + $0x20] sm:$0xf]
    %v1141 = vld [vmem:[#allocation11 + $0x24] sm:$0xf]
    %v1142 = vld [vmem:[#allocation11 + $0x28] sm:$0xf]
    %v1143 = vld [vmem:[#allocation11 + $0x2c] sm:$0xf]
    %v1144 = vld [vmem:[#allocation11 + $0x30] sm:$0xf]
    %v1145 = vld [vmem:[#allocation11 + $0x34] sm:$0xf]
    %v1146 = vld [vmem:[#allocation11 + $0x38] sm:$0xf]
    %v1147 = vld [vmem:[#allocation11 + $0x3c] sm:$0xf]
    %v1148 = vld [vmem:[%s8] sm:$0x1]
    %v1150 = vperm.slane %v1148, 0
    %v1168 = vunpack.c.l.b16 %v1132
    %v1169 = vunpack.c.l.b16 %v1133
    %v1170 = vunpack.c.l.b16 %v1134
    %v1171 = vunpack.c.l.b16 %v1135
    %v1172 = vunpack.c.l.b16 %v1136
    %v1173 = vunpack.c.l.b16 %v1137
    %v1174 = vunpack.c.l.b16 %v1138
    %v1175 = vunpack.c.l.b16 %v1139
    %v1176 = vunpack.c.l.b16 %v1140
    %v1177 = vunpack.c.l.b16 %v1141
    %v1178 = vunpack.c.l.b16 %v1142
    %v1179 = vunpack.c.l.b16 %v1143
    %v1180 = vunpack.c.l.b16 %v1144
    %v1181 = vunpack.c.l.b16 %v1145
    %v1182 = vunpack.c.l.b16 %v1146
    %v1183 = vunpack.c.l.b16 %v1147
    %v1184 = vpack.c.b16 %v1169, %v1168
    %v1185 = vpack.c.b16 %v1171, %v1170
    %v1186 = vpack.c.b16 %v1173, %v1172
    %v1187 = vpack.c.b16 %v1175, %v1174
    %v1188 = vpack.c.b16 %v1177, %v1176
    %v1189 = vpack.c.b16 %v1179, %v1178
    %v1190 = vpack.c.b16 %v1181, %v1180
    %v1191 = vpack.c.b16 %v1183, %v1182
    %1200 = vmatpush.bf16.msra.mxu0 %v1191
    %1201 = vmatpush.bf16.msra.mxu0 %v1190
    %1202 = vmatpush.bf16.msra.mxu0 %v1189
    %1203 = vmatpush.bf16.msra.mxu0 %v1188
    %1204 = vmatpush.bf16.msra.mxu0 %v1187
    %1205 = vmatpush.bf16.msra.mxu0 %v1186
    %1206 = vmatpush.bf16.msra.mxu0 %v1185
    %1207 = vmatpush.bf16.msra.mxu0 %v1184
    %1208 = vmatmul.bf16.gmra.mxu0 %v1131
    %v1209 = vpop.f32.mrf.mxu0
    %v1210 = vadd.f32 %v1150, %v1209
    %v1211 = vpop.f32.mrf.mxu0
    %1212 = vdwg.mxu0
    %1213 = vst [vmem:[#allocation13] sm:$0xff] %v1210
    // Predicated region
    $region62: #{tpu_custom_call.1} parent=1 // pred_check
      _
    $region63: #{tpu_custom_call.1} parent=1 // pred_check_branch
      %1215 = sbr.rel (0) target = $region65
    $region64: #{tpu_custom_call.1} parent=1 // pred_region
      %1217 = vsyncadd [#allocation4], 0
      %s1219 = sshll.u32 [#allocation13], 4
      %s1220 = int_to_ptr.vmem [resolvable:$true] %s1219
      %s1221 = sshll.u32 %s9, 4
      %s1222 = int_to_ptr.hbm [resolvable:$true] %s1221
      %1224 = dma.vmem_to_hbm [thread:$0]  %s1220, 128, %s1222, [#allocation4]
    $region65: #{tpu_custom_call.1} parent=1 // pred_fallthru
      _
    // Predicated region
    $region66: #{tpu_custom_call.1} parent=1 // pred_check
      _
    $region67: #{tpu_custom_call.1} parent=1 // pred_check_branch
      %1226 = sbr.rel (0) target = $region69
    $region68: #{tpu_custom_call.1} parent=1 // pred_region
      %1228 = dma.done [#allocation4], 128
    $region69: #{tpu_custom_call.1} parent=1 // pred_fallthru
      _
    %1229 = vsyncpa [#allocation3], 1
    %1230 = vsyncpa [#allocation6], 1
    %1231 = vsyncpa [#allocation9], 1
    %1232 = vsyncpa [#allocation12], 1
    %1233 = vsyncpa [#allocation4], 1

</llo_original>
